<compile_context>
chip_gen: v7x
topology: tpu7x:2x2x1
jax: 0.10.0
libtpu: 0.0.40
codegen_flags: <defaults>
</compile_context>

<pallas_src>
import functools

import jax
import jax.numpy as jnp
from jax.experimental import pallas as pl
from jax.experimental.pallas import tpu as pltpu

NEG_SLOPE = 0.01   # PyTorch LeakyReLU default
BN_EPS = 1e-5      # PyTorch BatchNorm1d default


def _round_up(x, m):
    return (x + m - 1) // m * m


def _leaky_relu(x):
    return jnp.where(x >= 0, x, NEG_SLOPE * x)


# --------------------------------------------------------------------------
# Kernel
# --------------------------------------------------------------------------
def mlp_kernel(x_ref, w1_ref, b1_ref, s1_ref, t1_ref,
               wsk_ref, bsk_ref, ssk_ref, tsk_ref,
               wf_ref, bf_ref,
               out_ref, h_ref):
    l = pl.program_id(1)
    n_l = pl.num_programs(1)

    # ---- Linear_block: fc -> LeakyReLU -> (dropout: identity) -> BN(eval)
    # Only on the first layer step of each batch tile.
    @pl.when(l == 0)
    def _():
        x = x_ref[...]
        h0 = jnp.dot(x.astype(jnp.bfloat16), w1_ref[...],
                     preferred_element_type=jnp.float32) + b1_ref[...]
        h0 = _leaky_relu(h0)
        h_ref[...] = h0 * s1_ref[...] + t1_ref[...]

    # ---- One Linear_skip_block per layer grid step (weights streamed):
    # fc -> LeakyReLU -> skip add -> (dropout: identity) -> BN(eval)
    h = h_ref[...]
    y = jnp.dot(h.astype(jnp.bfloat16), wsk_ref[0],
                preferred_element_type=jnp.float32) + bsk_ref[0]
    y = _leaky_relu(y)
    h = h + y
    h = h * ssk_ref[0] + tsk_ref[0]
    h_ref[...] = h

    # ---- Final Linear on the last layer step.
    @pl.when(l == n_l - 1)
    def _():
        out = jnp.dot(h.astype(jnp.bfloat16), wf_ref[...],
                      preferred_element_type=jnp.float32) + bf_ref[...]
        out_ref[...] = out.astype(out_ref.dtype)


# --------------------------------------------------------------------------
# Wrapper: pack/pad params, build grid + BlockSpecs, call the kernel
# --------------------------------------------------------------------------
def pack_params(p):
    """Fold BN into scale/shift, pad feature dims to multiples of 128,
    cast matmul weights to bf16. Padding is zero (scale padded with 1) so
    padded channels stay exactly zero through every layer."""
    d_in, n_hid = p["w1"].shape
    n_out = p["w_final"].shape[1]

    dp = _round_up(d_in, 128)
    hp = _round_up(n_hid, 128)
    op = _round_up(n_out, 128)

    def pad2(a, r, c):
        return jnp.pad(a, ((0, r - a.shape[0]), (0, c - a.shape[1])))

    def pad_row(a, n, fill=0.0):
        a = jnp.pad(a, (0, n - a.shape[0]), constant_values=fill)
        return a.reshape(1, n).astype(jnp.float32)

    def fold_bn(g, be, m, v):
        s = g * jax.lax.rsqrt(v + BN_EPS)
        t = be - m * s
        return s, t

    s1, t1 = fold_bn(p["g1"], p["be1"], p["m1"], p["v1"])

    if p["w_skip"].shape[0] > 0:
        w_skip, b_skip = p["w_skip"], p["b_skip"]
        g_skip, be_skip = p["g_skip"], p["be_skip"]
        m_skip, v_skip = p["m_skip"], p["v_skip"]
    else:
        # No skip layers: insert a single exact-identity layer so the layer
        # grid axis has extent >= 1 (w=0, b=0, scale=1, shift=0).
        w_skip = jnp.zeros((1, n_hid, n_hid), jnp.float32)
        b_skip = jnp.zeros((1, n_hid), jnp.float32)
        g_skip = jnp.ones((1, n_hid), jnp.float32)
        be_skip = jnp.zeros((1, n_hid), jnp.float32)
        m_skip = jnp.zeros((1, n_hid), jnp.float32)
        v_skip = jnp.full((1, n_hid), 1.0 - BN_EPS, jnp.float32)

    ssk, tsk = fold_bn(g_skip, be_skip, m_skip, v_skip)

    def pad_layer_row(a, fill):
        a = jnp.pad(a, ((0, 0), (0, hp - a.shape[1])), constant_values=fill)
        return a.reshape(a.shape[0], 1, hp).astype(jnp.float32)

    return {
        "w1": pad2(p["w1"], dp, hp).astype(jnp.bfloat16),
        "b1": pad_row(p["b1"], hp, 0.0),
        "s1": pad_row(s1, hp, 1.0),
        "t1": pad_row(t1, hp, 0.0),
        "w_skip": jnp.pad(w_skip, ((0, 0), (0, hp - n_hid), (0, hp - n_hid))
                          ).astype(jnp.bfloat16),
        "b_skip": pad_layer_row(b_skip, 0.0),
        "s_skip": pad_layer_row(ssk, 1.0),
        "t_skip": pad_layer_row(tsk, 0.0),
        "w_final": pad2(p["w_final"], hp, op).astype(jnp.bfloat16),
        "b_final": pad_row(p["b_final"], op, 0.0),
        "dims": (d_in, n_hid, n_out, dp, hp, op),
    }


def mlp_forward(packed, x):
    d_in, _, n_out, dp, hp, op = packed["dims"]
    B = x.shape[0]

    # Batch tile: lane-dense features, sublane-aligned batch tile.
    bp = _round_up(max(B, 1), 8)
    tb = min(bp, 256)
    bp = _round_up(bp, tb)

    xp = jnp.pad(x.astype(jnp.float32), ((0, bp - B), (0, dp - d_in)))

    n_layers = packed["w_skip"].shape[0]
    grid = (bp // tb, n_layers)

    batch2 = lambda i, l: (i, 0)     # batch-tiled 2-D arrays
    const2 = lambda i, l: (0, 0)     # resident 2-D params (copied once)
    layer3 = lambda i, l: (l, 0, 0)  # per-layer streamed params

    out_padded = pl.pallas_call(
        mlp_kernel,
        out_shape=jax.ShapeDtypeStruct((bp, op), jnp.float32),
        grid=grid,
        in_specs=[
            pl.BlockSpec((tb, dp), batch2),        # x
            pl.BlockSpec((dp, hp), const2),        # w1
            pl.BlockSpec((1, hp), const2),         # b1
            pl.BlockSpec((1, hp), const2),         # s1
            pl.BlockSpec((1, hp), const2),         # t1
            pl.BlockSpec((1, hp, hp), layer3),     # w_skip[l]
            pl.BlockSpec((1, 1, hp), layer3),      # b_skip[l]
            pl.BlockSpec((1, 1, hp), layer3),      # s_skip[l]
            pl.BlockSpec((1, 1, hp), layer3),      # t_skip[l]
            pl.BlockSpec((hp, op), const2),        # w_final
            pl.BlockSpec((1, op), const2),         # b_final
        ],
        out_specs=pl.BlockSpec((tb, op), batch2),
        scratch_shapes=[pltpu.VMEM((tb, hp), jnp.float32)],  # carried activation
        compiler_params=pltpu.CompilerParams(
            dimension_semantics=("parallel", "arbitrary"),
            vmem_limit_bytes=64 * 1024 * 1024,
        ),
    )(xp,
      packed["w1"], packed["b1"], packed["s1"], packed["t1"],
      packed["w_skip"], packed["b_skip"], packed["s_skip"], packed["t_skip"],
      packed["w_final"], packed["b_final"])

    return out_padded[:B, :n_out]


# --------------------------------------------------------------------------
# Parameter init (PyTorch-like) and plain-JAX reference
# --------------------------------------------------------------------------
def init_params(key, n_input, n_output, n_hidden, n_skip_layers):
    ks = jax.random.split(key, 8)

    def lin_init(k, fan_in, fan_out):
        bound = 1.0 / jnp.sqrt(jnp.float32(fan_in))
        kw, kb = jax.random.split(k)
        w = jax.random.uniform(kw, (fan_in, fan_out), jnp.float32, -bound, bound)
        b = jax.random.uniform(kb, (fan_out,), jnp.float32, -bound, bound)
        return w, b

    w1, b1 = lin_init(ks[0], n_input, n_hidden)
    g1 = 1.0 + 0.1 * jax.random.normal(ks[1], (n_hidden,), jnp.float32)
    be1 = 0.1 * jax.random.normal(ks[2], (n_hidden,), jnp.float32)
    m1 = 0.1 * jax.random.normal(ks[3], (n_hidden,), jnp.float32)
    v1 = 1.0 + 0.1 * jax.random.uniform(ks[4], (n_hidden,), jnp.float32)

    w_skip, b_skip = [], []
    g_skip, be_skip, m_skip, v_skip = [], [], [], []
    for l in range(n_skip_layers):
        kk = jax.random.fold_in(ks[5], l)
        kks = jax.random.split(kk, 5)
        w, b = lin_init(kks[0], n_hidden, n_hidden)
        w_skip.append(w)
        b_skip.append(b)
        g_skip.append(1.0 + 0.1 * jax.random.normal(kks[1], (n_hidden,), jnp.float32))
        be_skip.append(0.1 * jax.random.normal(kks[2], (n_hidden,), jnp.float32))
        m_skip.append(0.1 * jax.random.normal(kks[3], (n_hidden,), jnp.float32))
        v_skip.append(1.0 + 0.1 * jax.random.uniform(kks[4], (n_hidden,), jnp.float32))

    wf, bf = lin_init(ks[6], n_hidden, n_output)

    stack = lambda xs, shape: (jnp.stack(xs) if xs else jnp.zeros((0,) + shape, jnp.float32))
    return {
        "w1": w1, "b1": b1, "g1": g1, "be1": be1, "m1": m1, "v1": v1,
        "w_skip": stack(w_skip, (n_hidden, n_hidden)),
        "b_skip": stack(b_skip, (n_hidden,)),
        "g_skip": stack(g_skip, (n_hidden,)),
        "be_skip": stack(be_skip, (n_hidden,)),
        "m_skip": stack(m_skip, (n_hidden,)),
        "v_skip": stack(v_skip, (n_hidden,)),
        "w_final": wf, "b_final": bf,
    }


def mlp_reference(p, x):
    """Plain-JAX eval-mode forward using the same bf16-weight / f32-accumulate
    numerics as the kernel, for verification."""
    def mm(a, w):
        return jnp.dot(a.astype(jnp.bfloat16), w.astype(jnp.bfloat16),
                       preferred_element_type=jnp.float32)

    def bn(h, g, be, m, v):
        s = g * jax.lax.rsqrt(v + BN_EPS)
        return h * s + (be - m * s)

    h = mm(x, p["w1"]) + p["b1"]
    h = _leaky_relu(h)
    h = bn(h, p["g1"], p["be1"], p["m1"], p["v1"])
    for l in range(p["w_skip"].shape[0]):
        y = mm(h, p["w_skip"][l]) + p["b_skip"][l]
        y = _leaky_relu(y)
        h = h + y
        h = bn(h, p["g_skip"][l], p["be_skip"][l], p["m_skip"][l], p["v_skip"][l])
    return mm(h, p["w_final"]) + p["b_final"]


if __name__ == "__main__":
    # Small shapes consistent with the module's forward: x is (batch, n_input_units)
    B = 8
    N_INPUT = 16
    N_HIDDEN = 32
    N_OUTPUT = 4
    N_SKIP_LAYERS = 2
    # dropout_rate is irrelevant in the eval-mode forward (identity)

    key = jax.random.PRNGKey(0)
    kp, kx = jax.random.split(key)
    params = init_params(kp, N_INPUT, N_OUTPUT, N_HIDDEN, N_SKIP_LAYERS)
    x = jax.random.normal(kx, (B, N_INPUT), jnp.float32)

    packed = pack_params(params)
    out = mlp_forward(packed, x)
    out = jax.block_until_ready(out)

    ref = mlp_reference(params, x)
    assert out.shape == (B, N_OUTPUT)
    assert jnp.allclose(out, ref, atol=2e-3, rtol=2e-3), "kernel/reference mismatch"

    print("KERNEL_OK")
</pallas_src>

<mosaic_0001>
module attributes {stable_mosaic.version = 11 : i64} {
  func.func @mlp_kernel(%arg0: i32, %arg1: i32, %arg2: memref<8x128xf32, #tpu.memory_space<vmem>>, %arg3: memref<128x128xbf16, #tpu.memory_space<vmem>>, %arg4: memref<1x128xf32, #tpu.memory_space<vmem>>, %arg5: memref<1x128xf32, #tpu.memory_space<vmem>>, %arg6: memref<1x128xf32, #tpu.memory_space<vmem>>, %arg7: memref<1x128x128xbf16, #tpu.memory_space<vmem>>, %arg8: memref<1x1x128xf32, #tpu.memory_space<vmem>>, %arg9: memref<1x1x128xf32, #tpu.memory_space<vmem>>, %arg10: memref<1x1x128xf32, #tpu.memory_space<vmem>>, %arg11: memref<128x128xbf16, #tpu.memory_space<vmem>>, %arg12: memref<1x128xf32, #tpu.memory_space<vmem>>, %arg13: memref<8x128xf32, #tpu.memory_space<vmem>>, %arg14: memref<8x128xf32, #tpu.memory_space<vmem>>) attributes {dimension_semantics = [#tpu.dimension_semantics<parallel>, #tpu.dimension_semantics<arbitrary>], iteration_bounds = array<i64: 1, 2>, scalar_prefetch = 0 : i64, scratch_operands = 1 : i64, tpu.core_type = #tpu.core_type<tc>, window_params = [{transform_indices = @transform_0, window_bounds = array<i64: 8, 128>}, {pipeline_mode = #tpu.pipeline_mode<synchronous>, transform_indices = @transform_1, window_bounds = array<i64: 128, 128>}, {pipeline_mode = #tpu.pipeline_mode<synchronous>, transform_indices = @transform_2, window_bounds = array<i64: 1, 128>}, {pipeline_mode = #tpu.pipeline_mode<synchronous>, transform_indices = @transform_3, window_bounds = array<i64: 1, 128>}, {pipeline_mode = #tpu.pipeline_mode<synchronous>, transform_indices = @transform_4, window_bounds = array<i64: 1, 128>}, {transform_indices = @transform_5, window_bounds = array<i64: 1, 128, 128>}, {transform_indices = @transform_6, window_bounds = array<i64: 1, 1, 128>}, {transform_indices = @transform_7, window_bounds = array<i64: 1, 1, 128>}, {transform_indices = @transform_8, window_bounds = array<i64: 1, 1, 128>}, {pipeline_mode = #tpu.pipeline_mode<synchronous>, transform_indices = @transform_9, window_bounds = array<i64: 128, 128>}, {pipeline_mode = #tpu.pipeline_mode<synchronous>, transform_indices = @transform_10, window_bounds = array<i64: 1, 128>}, {transform_indices = @transform_11, window_bounds = array<i64: 8, 128>}]} {
    %c0_i32 = arith.constant 0 : i32
    %0 = arith.cmpi eq, %arg1, %c0_i32 : i32
    %1 = arith.extui %0 : i1 to i32
    %c0_i32_0 = arith.constant 0 : i32
    %2 = arith.cmpi ne, %1, %c0_i32_0 : i32
    scf.if %2 {
      %c0_19 = arith.constant 0 : index
      %c0_20 = arith.constant 0 : index
      %30 = vector.load %arg2[%c0_19, %c0_20] : memref<8x128xf32, #tpu.memory_space<vmem>>, vector<8x128xf32>
      %31 = arith.truncf %30 : vector<8x128xf32> to vector<8x128xbf16>
      %c0_21 = arith.constant 0 : index
      %c0_22 = arith.constant 0 : index
      %32 = vector.load %arg3[%c0_21, %c0_22] : memref<128x128xbf16, #tpu.memory_space<vmem>>, vector<128x128xbf16>
      %cst_23 = arith.constant dense<0.000000e+00> : vector<8x128xf32>
      %33 = tpu.matmul %31, %32, %cst_23 {dimension_numbers = #tpu.dot_dimension_numbers<[1], [0], [0], [1], [0, 0, 1, 1], [], []>} : vector<8x128xbf16>, vector<128x128xbf16>, vector<8x128xf32> -> vector<8x128xf32>
      %c0_24 = arith.constant 0 : index
      %c0_25 = arith.constant 0 : index
      %34 = vector.load %arg4[%c0_24, %c0_25] : memref<1x128xf32, #tpu.memory_space<vmem>>, vector<1x128xf32>
      %35 = vector.broadcast %34 : vector<1x128xf32> to vector<8x128xf32>
      %36 = arith.addf %33, %35 : vector<8x128xf32>
      %cst_26 = arith.constant 0.000000e+00 : f32
      %37 = vector.broadcast %cst_26 : f32 to vector<8x128xf32>
      %38 = arith.cmpf oge, %36, %37 : vector<8x128xf32>
      %cst_27 = arith.constant 0.00999999977 : f32
      %39 = vector.broadcast %cst_27 : f32 to vector<8x128xf32>
      %40 = arith.mulf %39, %36 : vector<8x128xf32>
      %41 = arith.select %38, %36, %40 : vector<8x128xi1>, vector<8x128xf32>
      %c0_28 = arith.constant 0 : index
      %c0_29 = arith.constant 0 : index
      %42 = vector.load %arg5[%c0_28, %c0_29] : memref<1x128xf32, #tpu.memory_space<vmem>>, vector<1x128xf32>
      %43 = vector.broadcast %42 : vector<1x128xf32> to vector<8x128xf32>
      %44 = arith.mulf %41, %43 : vector<8x128xf32>
      %c0_30 = arith.constant 0 : index
      %c0_31 = arith.constant 0 : index
      %45 = vector.load %arg6[%c0_30, %c0_31] : memref<1x128xf32, #tpu.memory_space<vmem>>, vector<1x128xf32>
      %46 = vector.broadcast %45 : vector<1x128xf32> to vector<8x128xf32>
      %47 = arith.addf %44, %46 : vector<8x128xf32>
      %c0_32 = arith.constant 0 : index
      %c0_33 = arith.constant 0 : index
      %48 = vector.load %arg14[%c0_32, %c0_33] : memref<8x128xf32, #tpu.memory_space<vmem>>, vector<8x128xf32>
      tpu.vector_store %arg14[%c0_32, %c0_33], %47 {strides = array<i32>} : memref<8x128xf32, #tpu.memory_space<vmem>>, vector<8x128xf32>,
    } else {
    }
    %c0 = arith.constant 0 : index
    %c0_1 = arith.constant 0 : index
    %3 = vector.load %arg14[%c0, %c0_1] : memref<8x128xf32, #tpu.memory_space<vmem>>, vector<8x128xf32>
    %4 = arith.truncf %3 : vector<8x128xf32> to vector<8x128xbf16>
    %c0_2 = arith.constant 0 : index
    %c0_3 = arith.constant 0 : index
    %c0_4 = arith.constant 0 : index
    %5 = vector.load %arg7[%c0_2, %c0_3, %c0_4] : memref<1x128x128xbf16, #tpu.memory_space<vmem>>, vector<1x128x128xbf16>
    %6 = vector.shape_cast %5 : vector<1x128x128xbf16> to vector<128x128xbf16>
    %cst = arith.constant dense<0.000000e+00> : vector<8x128xf32>
    %7 = tpu.matmul %4, %6, %cst {dimension_numbers = #tpu.dot_dimension_numbers<[1], [0], [0], [1], [0, 0, 1, 1], [], []>} : vector<8x128xbf16>, vector<128x128xbf16>, vector<8x128xf32> -> vector<8x128xf32>
    %c0_5 = arith.constant 0 : index
    %c0_6 = arith.constant 0 : index
    %c0_7 = arith.constant 0 : index
    %8 = vector.load %arg8[%c0_5, %c0_6, %c0_7] : memref<1x1x128xf32, #tpu.memory_space<vmem>>, vector<1x1x128xf32>
    %9 = vector.shape_cast %8 : vector<1x1x128xf32> to vector<1x128xf32>
    %10 = vector.broadcast %9 : vector<1x128xf32> to vector<8x128xf32>
    %11 = arith.addf %7, %10 : vector<8x128xf32>
    %cst_8 = arith.constant 0.000000e+00 : f32
    %12 = vector.broadcast %cst_8 : f32 to vector<8x128xf32>
    %13 = arith.cmpf oge, %11, %12 : vector<8x128xf32>
    %cst_9 = arith.constant 0.00999999977 : f32
    %14 = vector.broadcast %cst_9 : f32 to vector<8x128xf32>
    %15 = arith.mulf %14, %11 : vector<8x128xf32>
    %16 = arith.select %13, %11, %15 : vector<8x128xi1>, vector<8x128xf32>
    %17 = arith.addf %3, %16 : vector<8x128xf32>
    %c0_10 = arith.constant 0 : index
    %c0_11 = arith.constant 0 : index
    %c0_12 = arith.constant 0 : index
    %18 = vector.load %arg9[%c0_10, %c0_11, %c0_12] : memref<1x1x128xf32, #tpu.memory_space<vmem>>, vector<1x1x128xf32>
    %19 = vector.shape_cast %18 : vector<1x1x128xf32> to vector<1x128xf32>
    %20 = vector.broadcast %19 : vector<1x128xf32> to vector<8x128xf32>
    %21 = arith.mulf %17, %20 : vector<8x128xf32>
    %c0_13 = arith.constant 0 : index
    %c0_14 = arith.constant 0 : index
    %c0_15 = arith.constant 0 : index
    %22 = vector.load %arg10[%c0_13, %c0_14, %c0_15] : memref<1x1x128xf32, #tpu.memory_space<vmem>>, vector<1x1x128xf32>
    %23 = vector.shape_cast %22 : vector<1x1x128xf32> to vector<1x128xf32>
    %24 = vector.broadcast %23 : vector<1x128xf32> to vector<8x128xf32>
    %25 = arith.addf %21, %24 : vector<8x128xf32>
    %c0_16 = arith.constant 0 : index
    %c0_17 = arith.constant 0 : index
    %26 = vector.load %arg14[%c0_16, %c0_17] : memref<8x128xf32, #tpu.memory_space<vmem>>, vector<8x128xf32>
    tpu.vector_store %arg14[%c0_16, %c0_17], %25 {strides = array<i32>} : memref<8x128xf32, #tpu.memory_space<vmem>>, vector<8x128xf32>,
    %c1_i32 = arith.constant 1 : i32
    %27 = arith.cmpi eq, %arg1, %c1_i32 : i32
    %28 = arith.extui %27 : i1 to i32
    %c0_i32_18 = arith.constant 0 : i32
    %29 = arith.cmpi ne, %28, %c0_i32_18 : i32
    scf.if %29 {
      %30 = arith.truncf %25 : vector<8x128xf32> to vector<8x128xbf16>
      %c0_19 = arith.constant 0 : index
      %c0_20 = arith.constant 0 : index
      %31 = vector.load %arg11[%c0_19, %c0_20] : memref<128x128xbf16, #tpu.memory_space<vmem>>, vector<128x128xbf16>
      %cst_21 = arith.constant dense<0.000000e+00> : vector<8x128xf32>
      %32 = tpu.matmul %30, %31, %cst_21 {dimension_numbers = #tpu.dot_dimension_numbers<[1], [0], [0], [1], [0, 0, 1, 1], [], []>} : vector<8x128xbf16>, vector<128x128xbf16>, vector<8x128xf32> -> vector<8x128xf32>
      %c0_22 = arith.constant 0 : index
      %c0_23 = arith.constant 0 : index
      %33 = vector.load %arg12[%c0_22, %c0_23] : memref<1x128xf32, #tpu.memory_space<vmem>>, vector<1x128xf32>
      %34 = vector.broadcast %33 : vector<1x128xf32> to vector<8x128xf32>
      %35 = arith.addf %32, %34 : vector<8x128xf32>
      %c0_24 = arith.constant 0 : index
      %c0_25 = arith.constant 0 : index
      %36 = vector.load %arg13[%c0_24, %c0_25] : memref<8x128xf32, #tpu.memory_space<vmem>>, vector<8x128xf32>
      tpu.vector_store %arg13[%c0_24, %c0_25], %35 {strides = array<i32>} : memref<8x128xf32, #tpu.memory_space<vmem>>, vector<8x128xf32>,
    } else {
    }
    return
  }
  func.func @transform_0(%arg0: i32, %arg1: i32) -> (i32, i32) {
    %c0_i32 = arith.constant 0 : i32
    %c0_i32_0 = arith.constant 0 : i32
    return %arg0, %c0_i32 : i32, i32
  }
  func.func @transform_1(%arg0: i32, %arg1: i32) -> (i32, i32) {
    %c0_i32 = arith.constant 0 : i32
    %c0_i32_0 = arith.constant 0 : i32
    %c0_i32_1 = arith.constant 0 : i32
    return %c0_i32, %c0_i32_0 : i32, i32
  }
  func.func @transform_2(%arg0: i32, %arg1: i32) -> (i32, i32) {
    %c0_i32 = arith.constant 0 : i32
    %c0_i32_0 = arith.constant 0 : i32
    %c0_i32_1 = arith.constant 0 : i32
    return %c0_i32, %c0_i32_0 : i32, i32
  }
  func.func @transform_3(%arg0: i32, %arg1: i32) -> (i32, i32) {
    %c0_i32 = arith.constant 0 : i32
    %c0_i32_0 = arith.constant 0 : i32
    %c0_i32_1 = arith.constant 0 : i32
    return %c0_i32, %c0_i32_0 : i32, i32
  }
  func.func @transform_4(%arg0: i32, %arg1: i32) -> (i32, i32) {
    %c0_i32 = arith.constant 0 : i32
    %c0_i32_0 = arith.constant 0 : i32
    %c0_i32_1 = arith.constant 0 : i32
    return %c0_i32, %c0_i32_0 : i32, i32
  }
  func.func @transform_5(%arg0: i32, %arg1: i32) -> (i32, i32, i32) {
    %c0_i32 = arith.constant 0 : i32
    %c0_i32_0 = arith.constant 0 : i32
    %c0_i32_1 = arith.constant 0 : i32
    return %arg1, %c0_i32, %c0_i32_0 : i32, i32, i32
  }
  func.func @transform_6(%arg0: i32, %arg1: i32) -> (i32, i32, i32) {
    %c0_i32 = arith.constant 0 : i32
    %c0_i32_0 = arith.constant 0 : i32
    %c0_i32_1 = arith.constant 0 : i32
    return %arg1, %c0_i32, %c0_i32_0 : i32, i32, i32
  }
  func.func @transform_7(%arg0: i32, %arg1: i32) -> (i32, i32, i32) {
    %c0_i32 = arith.constant 0 : i32
    %c0_i32_0 = arith.constant 0 : i32
    %c0_i32_1 = arith.constant 0 : i32
    return %arg1, %c0_i32, %c0_i32_0 : i32, i32, i32
  }
  func.func @transform_8(%arg0: i32, %arg1: i32) -> (i32, i32, i32) {
    %c0_i32 = arith.constant 0 : i32
    %c0_i32_0 = arith.constant 0 : i32
    %c0_i32_1 = arith.constant 0 : i32
    return %arg1, %c0_i32, %c0_i32_0 : i32, i32, i32
  }
  func.func @transform_9(%arg0: i32, %arg1: i32) -> (i32, i32) {
    %c0_i32 = arith.constant 0 : i32
    %c0_i32_0 = arith.constant 0 : i32
    %c0_i32_1 = arith.constant 0 : i32
    return %c0_i32, %c0_i32_0 : i32, i32
  }
  func.func @transform_10(%arg0: i32, %arg1: i32) -> (i32, i32) {
    %c0_i32 = arith.constant 0 : i32
    %c0_i32_0 = arith.constant 0 : i32
    %c0_i32_1 = arith.constant 0 : i32
    return %c0_i32, %c0_i32_0 : i32, i32
  }
  func.func @transform_11(%arg0: i32, %arg1: i32) -> (i32, i32) {
    %c0_i32 = arith.constant 0 : i32
    %c0_i32_0 = arith.constant 0 : i32
    return %arg0, %c0_i32 : i32, i32
  }
}

</mosaic_0001>

<llo_original>
// kernel: tpu_custom_call.1
$region0: #{tpu_custom_call.1}
  #allocation0 [shape = 'u32[]', space=smem, size = 0x4, offset = 0x4, fixed_abs, tag = 'smem constant byte address 0x4 - core index']
  #allocation1 [shape = 'u32[144,128]{1,0:T(1,128)}', space=vmem, size = 0x12000, scoped, tag = 'internal scratch']
  #allocation2 [shape = 'f32[8,128]{1,0:T(8,128)}', space=vmem, size = 0x1000, scoped, tag = 'scratch operand']
  %s0 = inlined_call_operand.hbm [shape: f32[8,128], index: 0, kind: input, shape index: {}]
  %s1 = inlined_call_operand.hbm [shape: bf16[128,128], index: 1, kind: input, shape index: {}]
  %s2 = inlined_call_operand.hbm [shape: f32[1,128], index: 2, kind: input, shape index: {}]
  %s3 = inlined_call_operand.hbm [shape: f32[1,128], index: 3, kind: input, shape index: {}]
  %s4 = inlined_call_operand.hbm [shape: f32[1,128], index: 4, kind: input, shape index: {}]
  %s5 = inlined_call_operand.hbm [shape: bf16[2,128,128], index: 5, kind: input, shape index: {}]
  %s6 = inlined_call_operand.hbm [shape: f32[2,1,128], index: 6, kind: input, shape index: {}]
  %s7 = inlined_call_operand.hbm [shape: f32[2,1,128], index: 7, kind: input, shape index: {}]
  %s8 = inlined_call_operand.hbm [shape: f32[2,1,128], index: 8, kind: input, shape index: {}]
  %s9 = inlined_call_operand.hbm [shape: bf16[128,128], index: 9, kind: input, shape index: {}]
  %s10 = inlined_call_operand.hbm [shape: f32[1,128], index: 10, kind: input, shape index: {}]
  %s11 = inlined_call_operand.hbm [shape: f32[8,128], index: 11, kind: output, shape index: {}]
  %s12 = sld [smem:[#allocation0]]
  $region129: #{tpu_custom_call.1} parent=0
    _
  %s14 = ssub.s32 1, %s12
  %s15 = scalar_select 0, %s14, %s12
  $region1: #{tpu_custom_call.1} parent=0
    #allocation3 [shape = 'u8[4096]{0}', space=vmem, size = 0x1000, scoped, tag = 'input window, operand 0, single buffered']
    #allocation4 [shape = 's32[2]{0}', space=sflag, size = 0x8, scoped, tag = 'scoped memory for tpu_custom_call.1']
    #allocation5 [shape = 's32[2]{0}', space=sflag, size = 0x8, scoped, tag = 'scoped memory for tpu_custom_call.1']
    #allocation6 [shape = 'u8[32768]{0}', space=vmem, size = 0x8000, scoped, tag = 'input window, operand 1, single buffered']
    #allocation7 [shape = 's32[1]{0}', space=sflag, size = 0x4, scoped, tag = 'scoped memory for tpu_custom_call.1']
    #allocation8 [shape = 'u8[512]{0}', space=vmem, size = 0x400, scoped, tag = 'input window, operand 2, single buffered']
    #allocation9 [shape = 'u8[512]{0}', space=vmem, size = 0x400, scoped, tag = 'input window, operand 3, single buffered']
    #allocation10 [shape = 's32[1]{0}', space=sflag, size = 0x4, scoped, tag = 'scoped memory for tpu_custom_call.1']
    #allocation11 [shape = 'u8[512]{0}', space=vmem, size = 0x400, scoped, tag = 'input window, operand 4, single buffered']
    #allocation12 [shape = 'u8[65536]{0}', space=vmem, size = 0x10000, scoped, tag = 'input window, operand 5']
    #allocation13 [shape = 's32[2]{0}', space=sflag, size = 0x8, scoped, tag = 'scoped memory for tpu_custom_call.1']
    #allocation14 [shape = 'u8[1024]{0}', space=vmem, size = 0x400, scoped, tag = 'input window, operand 6']
    #allocation15 [shape = 'u8[1024]{0}', space=vmem, size = 0x400, scoped, tag = 'input window, operand 7']
    #allocation16 [shape = 's32[2]{0}', space=sflag, size = 0x8, scoped, tag = 'scoped memory for tpu_custom_call.1']
    #allocation17 [shape = 'u8[1024]{0}', space=vmem, size = 0x400, scoped, tag = 'input window, operand 8']
    #allocation18 [shape = 'u8[32768]{0}', space=vmem, size = 0x8000, scoped, tag = 'input window, operand 9, single buffered']
    #allocation19 [shape = 's32[1]{0}', space=sflag, size = 0x4, scoped, tag = 'scoped memory for tpu_custom_call.1']
    #allocation20 [shape = 'u8[512]{0}', space=vmem, size = 0x400, scoped, tag = 'input window, operand 10, single buffered']
    #allocation21 [shape = 'u8[4096]{0}', space=vmem, size = 0x1000, scoped, tag = 'output window, operand 0, single buffered']
    %16 = vsyncpa [#allocation4], 0
    %17 = vsyncpa [#allocation7], 0
    %18 = vsyncpa [#allocation10], 0
    %19 = vsyncpa [#allocation13], 0
    %s20 = scalar_lea.sflag [#allocation13], 1
    %21 = vsyncpa %s20, 0
    %22 = vsyncpa [#allocation16], 0
    %s23 = scalar_lea.sflag [#allocation16], 1
    %24 = vsyncpa %s23, 0
    %25 = vsyncpa [#allocation19], 0
    %26 = vsyncpa [#allocation5], 0
    loop: start=0, step=1, limit=4
    $region2: #{tpu_custom_call.1} parent=1 // loop_pre_header
      _
    $region3: #{tpu_custom_call.1} parent=1 // loop_header
      %s28 = sphi 0, %s32
      %p29 = scmp.ge.s32.totalorder %s28, 4
      %s35 = sphi 0, %s47
      %s36 = sphi 0, %s43
      %s37 = sphi 0, %s35
      %s38 = sphi 0, %s36
      %s39 = sphi 0, %s37
      %s40 = sphi 0, %s38
      %s50 = sphi 0, %s52
      %s53 = sphi 0, %s50
      %s54 = sphi 0, %s53
      %s70 = sphi 0, %s54
      %s74 = sphi 0, %s74
      %s76 = sphi 0, %s74
      %s77 = sphi 0, %s76
      %s91 = sphi 0, %s77
      %s95 = sphi 0, %s95
      %s97 = sphi 0, %s95
      %s98 = sphi 0, %s97
      %s112 = sphi 0, %s98
      %s116 = sphi 0, %s116
      %s118 = sphi 0, %s116
      %s119 = sphi 0, %s118
      %s133 = sphi 0, %s119
      %s137 = sphi 0, %s137
      %s139 = sphi 0, %s137
      %s140 = sphi 0, %s139
      %s154 = sphi 0, %s140
      %s160 = sphi 0, %s162
      %s163 = sphi 0, %s160
      %s164 = sphi 0, %s163
      %s180 = sphi 0, %s164
      %s186 = sphi 0, %s188
      %s189 = sphi 0, %s186
      %s190 = sphi 0, %s189
      %s206 = sphi 0, %s190
      %s212 = sphi 0, %s214
      %s215 = sphi 0, %s212
      %s216 = sphi 0, %s215
      %s232 = sphi 0, %s216
      %s238 = sphi 0, %s240
      %s241 = sphi 0, %s238
      %s242 = sphi 0, %s241
      %s258 = sphi 0, %s242
      %s262 = sphi 0, %s262
      %s264 = sphi 0, %s262
      %s265 = sphi 0, %s264
      %s279 = sphi 0, %s265
      %s283 = sphi 0, %s283
      %s285 = sphi 0, %s283
      %s286 = sphi 0, %s285
      %s300 = sphi 0, %s286
      %s306 = sphi 0, %s308
      %s309 = sphi 0, %s306
      %s310 = sphi 0, %s309
      %s326 = sphi 0, %s310
    $region4: #{tpu_custom_call.1} parent=1 // loop_header_branch
      %31 = sbr.rel (%p29) target = $region8
    $region5: #{tpu_custom_call.1} parent=1 // loop_body
      %s33 = ssub.s32 %s28, 1
      %s34 = ssub.s32 %s28, 2
      %s41 = sadd.s32 1, %s36
      %p42 = scmp.ge.s32.totalorder %s41, 2
      %s43 = scalar_select %p42, 0, %s41
      %s44 = sadd.s32 1, %s35
      %s45 = scalar_select %p42, %s44, %s35
      %p46 = scmp.ge.s32.totalorder %s45, 1
      %s47 = scalar_select %p46, 0, %s45
      %s48 = ssub.s32 %s35, %s47
      %p49 = scmp.eq.s32.totalorder %s48, 0
      %s51 = sadd.s32 %s50, 1
      %s52 = scalar_select %p49, %s50, %s51
      %p55 = pneg %p49
      %p56 = scmp.eq.s32.totalorder %s28, 1
      %p57 = por %p55, %p56
      %p58 = scmp.ne.s32.totalorder %s50, %s53
      %p59 = scmp.eq.s32.totalorder %s28, 0
      %p60 = por %p58, %p59
      %p61 = scmp.ne.s32.totalorder %s50, %s53
      %p62 = scmp.eq.s32.totalorder %s33, 1
      %p63 = por %p61, %p62
      %p64 = scmp.ne.s32.totalorder %s53, %s54
      %p65 = scmp.eq.s32.totalorder %s33, 0
      %p66 = por %p64, %p65
      %p67 = scmp.ne.s32.totalorder %s53, %s54
      %p68 = scmp.eq.s32.totalorder %s34, 1
      %p69 = por %p67, %p68
      %p71 = scmp.ne.s32.totalorder %s54, %s70
      %p72 = scmp.eq.s32.totalorder %s34, 0
      %p73 = por %p71, %p72
      %s75 = sadd.s32 %s74, 1
      %p78 = scmp.eq.s32.totalorder %s28, 1
      %p79 = scmp.ne.s32.totalorder %s74, %s76
      %p80 = scmp.eq.s32.totalorder %s28, 0
      %p81 = por %p79, %p80
      %p82 = scmp.ne.s32.totalorder %s74, %s76
      %p83 = scmp.eq.s32.totalorder %s33, 1
      %p84 = por %p82, %p83
      %p85 = scmp.ne.s32.totalorder %s76, %s77
      %p86 = scmp.eq.s32.totalorder %s33, 0
      %p87 = por %p85, %p86
      %p88 = scmp.ne.s32.totalorder %s76, %s77
      %p89 = scmp.eq.s32.totalorder %s34, 1
      %p90 = por %p88, %p89
      %p92 = scmp.ne.s32.totalorder %s77, %s91
      %p93 = scmp.eq.s32.totalorder %s34, 0
      %p94 = por %p92, %p93
      %s96 = sadd.s32 %s95, 1
      %p99 = scmp.eq.s32.totalorder %s28, 1
      %p100 = scmp.ne.s32.totalorder %s95, %s97
      %p101 = scmp.eq.s32.totalorder %s28, 0
      %p102 = por %p100, %p101
      %p103 = scmp.ne.s32.totalorder %s95, %s97
      %p104 = scmp.eq.s32.totalorder %s33, 1
      %p105 = por %p103, %p104
      %p106 = scmp.ne.s32.totalorder %s97, %s98
      %p107 = scmp.eq.s32.totalorder %s33, 0
      %p108 = por %p106, %p107
      %p109 = scmp.ne.s32.totalorder %s97, %s98
      %p110 = scmp.eq.s32.totalorder %s34, 1
      %p111 = por %p109, %p110
      %p113 = scmp.ne.s32.totalorder %s98, %s112
      %p114 = scmp.eq.s32.totalorder %s34, 0
      %p115 = por %p113, %p114
      %s117 = sadd.s32 %s116, 1
      %p120 = scmp.eq.s32.totalorder %s28, 1
      %p121 = scmp.ne.s32.totalorder %s116, %s118
      %p122 = scmp.eq.s32.totalorder %s28, 0
      %p123 = por %p121, %p122
      %p124 = scmp.ne.s32.totalorder %s116, %s118
      %p125 = scmp.eq.s32.totalorder %s33, 1
      %p126 = por %p124, %p125
      %p127 = scmp.ne.s32.totalorder %s118, %s119
      %p128 = scmp.eq.s32.totalorder %s33, 0
      %p129 = por %p127, %p128
      %p130 = scmp.ne.s32.totalorder %s118, %s119
      %p131 = scmp.eq.s32.totalorder %s34, 1
      %p132 = por %p130, %p131
      %p134 = scmp.ne.s32.totalorder %s119, %s133
      %p135 = scmp.eq.s32.totalorder %s34, 0
      %p136 = por %p134, %p135
      %s138 = sadd.s32 %s137, 1
      %p141 = scmp.eq.s32.totalorder %s28, 1
      %p142 = scmp.ne.s32.totalorder %s137, %s139
      %p143 = scmp.eq.s32.totalorder %s28, 0
      %p144 = por %p142, %p143
      %p145 = scmp.ne.s32.totalorder %s137, %s139
      %p146 = scmp.eq.s32.totalorder %s33, 1
      %p147 = por %p145, %p146
      %p148 = scmp.ne.s32.totalorder %s139, %s140
      %p149 = scmp.eq.s32.totalorder %s33, 0
      %p150 = por %p148, %p149
      %p151 = scmp.ne.s32.totalorder %s139, %s140
      %p152 = scmp.eq.s32.totalorder %s34, 1
      %p153 = por %p151, %p152
      %p155 = scmp.ne.s32.totalorder %s140, %s154
      %p156 = scmp.eq.s32.totalorder %s34, 0
      %p157 = por %p155, %p156
      %s158 = ssub.s32 %s36, %s43
      %p159 = scmp.eq.s32.totalorder %s158, 0
      %s161 = sadd.s32 %s160, 1
      %s162 = scalar_select %p159, %s160, %s161
      %p165 = pneg %p159
      %p166 = scmp.eq.s32.totalorder %s28, 1
      %p167 = por %p165, %p166
      %p168 = scmp.ne.s32.totalorder %s160, %s163
      %p169 = scmp.eq.s32.totalorder %s28, 0
      %p170 = por %p168, %p169
      %p171 = scmp.ne.s32.totalorder %s160, %s163
      %p172 = scmp.eq.s32.totalorder %s33, 1
      %p173 = por %p171, %p172
      %p174 = scmp.ne.s32.totalorder %s163, %s164
      %p175 = scmp.eq.s32.totalorder %s33, 0
      %p176 = por %p174, %p175
      %p177 = scmp.ne.s32.totalorder %s163, %s164
      %p178 = scmp.eq.s32.totalorder %s34, 1
      %p179 = por %p177, %p178
      %p181 = scmp.ne.s32.totalorder %s164, %s180
      %p182 = scmp.eq.s32.totalorder %s34, 0
      %p183 = por %p181, %p182
      %s184 = ssub.s32 %s36, %s43
      %p185 = scmp.eq.s32.totalorder %s184, 0
      %s187 = sadd.s32 %s186, 1
      %s188 = scalar_select %p185, %s186, %s187
      %p191 = pneg %p185
      %p192 = scmp.eq.s32.totalorder %s28, 1
      %p193 = por %p191, %p192
      %p194 = scmp.ne.s32.totalorder %s186, %s189
      %p195 = scmp.eq.s32.totalorder %s28, 0
      %p196 = por %p194, %p195
      %p197 = scmp.ne.s32.totalorder %s186, %s189
      %p198 = scmp.eq.s32.totalorder %s33, 1
      %p199 = por %p197, %p198
      %p200 = scmp.ne.s32.totalorder %s189, %s190
      %p201 = scmp.eq.s32.totalorder %s33, 0
      %p202 = por %p200, %p201
      %p203 = scmp.ne.s32.totalorder %s189, %s190
      %p204 = scmp.eq.s32.totalorder %s34, 1
      %p205 = por %p203, %p204
      %p207 = scmp.ne.s32.totalorder %s190, %s206
      %p208 = scmp.eq.s32.totalorder %s34, 0
      %p209 = por %p207, %p208
      %s210 = ssub.s32 %s36, %s43
      %p211 = scmp.eq.s32.totalorder %s210, 0
      %s213 = sadd.s32 %s212, 1
      %s214 = scalar_select %p211, %s212, %s213
      %p217 = pneg %p211
      %p218 = scmp.eq.s32.totalorder %s28, 1
      %p219 = por %p217, %p218
      %p220 = scmp.ne.s32.totalorder %s212, %s215
      %p221 = scmp.eq.s32.totalorder %s28, 0
      %p222 = por %p220, %p221
      %p223 = scmp.ne.s32.totalorder %s212, %s215
      %p224 = scmp.eq.s32.totalorder %s33, 1
      %p225 = por %p223, %p224
      %p226 = scmp.ne.s32.totalorder %s215, %s216
      %p227 = scmp.eq.s32.totalorder %s33, 0
      %p228 = por %p226, %p227
      %p229 = scmp.ne.s32.totalorder %s215, %s216
      %p230 = scmp.eq.s32.totalorder %s34, 1
      %p231 = por %p229, %p230
      %p233 = scmp.ne.s32.totalorder %s216, %s232
      %p234 = scmp.eq.s32.totalorder %s34, 0
      %p235 = por %p233, %p234
      %s236 = ssub.s32 %s36, %s43
      %p237 = scmp.eq.s32.totalorder %s236, 0
      %s239 = sadd.s32 %s238, 1
      %s240 = scalar_select %p237, %s238, %s239
      %p243 = pneg %p237
      %p244 = scmp.eq.s32.totalorder %s28, 1
      %p245 = por %p243, %p244
      %p246 = scmp.ne.s32.totalorder %s238, %s241
      %p247 = scmp.eq.s32.totalorder %s28, 0
      %p248 = por %p246, %p247
      %p249 = scmp.ne.s32.totalorder %s238, %s241
      %p250 = scmp.eq.s32.totalorder %s33, 1
      %p251 = por %p249, %p250
      %p252 = scmp.ne.s32.totalorder %s241, %s242
      %p253 = scmp.eq.s32.totalorder %s33, 0
      %p254 = por %p252, %p253
      %p255 = scmp.ne.s32.totalorder %s241, %s242
      %p256 = scmp.eq.s32.totalorder %s34, 1
      %p257 = por %p255, %p256
      %p259 = scmp.ne.s32.totalorder %s242, %s258
      %p260 = scmp.eq.s32.totalorder %s34, 0
      %p261 = por %p259, %p260
      %s263 = sadd.s32 %s262, 1
      %p266 = scmp.eq.s32.totalorder %s28, 1
      %p267 = scmp.ne.s32.totalorder %s262, %s264
      %p268 = scmp.eq.s32.totalorder %s28, 0
      %p269 = por %p267, %p268
      %p270 = scmp.ne.s32.totalorder %s262, %s264
      %p271 = scmp.eq.s32.totalorder %s33, 1
      %p272 = por %p270, %p271
      %p273 = scmp.ne.s32.totalorder %s264, %s265
      %p274 = scmp.eq.s32.totalorder %s33, 0
      %p275 = por %p273, %p274
      %p276 = scmp.ne.s32.totalorder %s264, %s265
      %p277 = scmp.eq.s32.totalorder %s34, 1
      %p278 = por %p276, %p277
      %p280 = scmp.ne.s32.totalorder %s265, %s279
      %p281 = scmp.eq.s32.totalorder %s34, 0
      %p282 = por %p280, %p281
      %s284 = sadd.s32 %s283, 1
      %p287 = scmp.eq.s32.totalorder %s28, 1
      %p288 = scmp.ne.s32.totalorder %s283, %s285
      %p289 = scmp.eq.s32.totalorder %s28, 0
      %p290 = por %p288, %p289
      %p291 = scmp.ne.s32.totalorder %s283, %s285
      %p292 = scmp.eq.s32.totalorder %s33, 1
      %p293 = por %p291, %p292
      %p294 = scmp.ne.s32.totalorder %s285, %s286
      %p295 = scmp.eq.s32.totalorder %s33, 0
      %p296 = por %p294, %p295
      %p297 = scmp.ne.s32.totalorder %s285, %s286
      %p298 = scmp.eq.s32.totalorder %s34, 1
      %p299 = por %p297, %p298
      %p301 = scmp.ne.s32.totalorder %s286, %s300
      %p302 = scmp.eq.s32.totalorder %s34, 0
      %p303 = por %p301, %p302
      %s304 = ssub.s32 %s35, %s47
      %p305 = scmp.eq.s32.totalorder %s304, 0
      %s307 = sadd.s32 %s306, 1
      %s308 = scalar_select %p305, %s306, %s307
      %p311 = pneg %p305
      %p312 = scmp.eq.s32.totalorder %s28, 1
      %p313 = por %p311, %p312
      %p314 = scmp.ne.s32.totalorder %s306, %s309
      %p315 = scmp.eq.s32.totalorder %s28, 0
      %p316 = por %p314, %p315
      %p317 = scmp.ne.s32.totalorder %s306, %s309
      %p318 = scmp.eq.s32.totalorder %s33, 1
      %p319 = por %p317, %p318
      %p320 = scmp.ne.s32.totalorder %s309, %s310
      %p321 = scmp.eq.s32.totalorder %s33, 0
      %p322 = por %p320, %p321
      %p323 = scmp.ne.s32.totalorder %s309, %s310
      %p324 = scmp.eq.s32.totalorder %s34, 1
      %p325 = por %p323, %p324
      %p327 = scmp.ne.s32.totalorder %s310, %s326
      %p328 = scmp.eq.s32.totalorder %s34, 0
      %p329 = por %p327, %p328
      %p330 = scmp.le.s32.totalorder 1, %s28
      %p331 = scmp.lt.s32.totalorder %s28, 3
      %p332 = pnand %p330, %p331
      %p333 = pneg %p332
      // Predicated region
      $region9: #{tpu_custom_call.1} parent=5 // pred_check
        _
      $region10: #{tpu_custom_call.1} parent=5 // pred_check_branch
        %335 = sbr.rel (%p332) target = $region12
      $region11: #{tpu_custom_call.1} parent=5 // pred_region
        %s336 = ssub.s32 %s28, 1
        // Predicated region
        $region13: #{tpu_custom_call.1} parent=11 // pred_check
          %p337 = pneg %p66
        $region14: #{tpu_custom_call.1} parent=11 // pred_check_branch
          %339 = sbr.rel (%p337) target = $region16
        $region15: #{tpu_custom_call.1} parent=11 // pred_region
          %s341 = ssub.s32 128, 128
          %342 = vsyncadd [#allocation4], %s341
          %s343 = smul.addr %s37, 128
          %s344 = scalar_lea.hbm %s0, %s343
          %s346 = sshll.u32 [#allocation3], 4
          %s347 = int_to_ptr.vmem [resolvable:$true] %s346
          %349 = dma.hbm_to_vmem [thread:$0]  %s344, 128, %s347, [#allocation4]
        $region16: #{tpu_custom_call.1} parent=11 // pred_fallthru
          _
        // Predicated region
        $region17: #{tpu_custom_call.1} parent=11 // pred_check
          %p350 = pneg %p87
        $region18: #{tpu_custom_call.1} parent=11 // pred_check_branch
          %352 = sbr.rel (%p350) target = $region20
        $region19: #{tpu_custom_call.1} parent=11 // pred_region
          %s354 = ssub.s32 1024, 1024
          %355 = vsyncadd [#allocation7], %s354
          %s356 = sshll.u32 [#allocation6], 4
          %s357 = int_to_ptr.vmem [resolvable:$true] %s356
          %362 = dma.hbm_to_vmem [thread:$0]  %s1, 1024, %s357, [#allocation7], 64, 64, 4
        $region20: #{tpu_custom_call.1} parent=11 // pred_fallthru
          _
        // Predicated region
        $region21: #{tpu_custom_call.1} parent=11 // pred_check
          %p363 = pneg %p108
        $region22: #{tpu_custom_call.1} parent=11 // pred_check_branch
          %365 = sbr.rel (%p363) target = $region24
        $region23: #{tpu_custom_call.1} parent=11 // pred_region
          %s367 = ssub.s32 16, 16
          %368 = vsyncadd [#allocation7], %s367
          %s370 = sshll.u32 [#allocation8], 4
          %s371 = int_to_ptr.vmem [resolvable:$true] %s370
          %373 = dma.hbm_to_vmem [thread:$0]  %s2, 16, %s371, [#allocation7]
        $region24: #{tpu_custom_call.1} parent=11 // pred_fallthru
          _
        // Predicated region
        $region25: #{tpu_custom_call.1} parent=11 // pred_check
          %p374 = pneg %p129
        $region26: #{tpu_custom_call.1} parent=11 // pred_check_branch
          %376 = sbr.rel (%p374) target = $region28
        $region27: #{tpu_custom_call.1} parent=11 // pred_region
          %s378 = ssub.s32 16, 16
          %379 = vsyncadd [#allocation10], %s378
          %s381 = sshll.u32 [#allocation9], 4
          %s382 = int_to_ptr.vmem [resolvable:$true] %s381
          %384 = dma.hbm_to_vmem [thread:$0]  %s3, 16, %s382, [#allocation10]
        $region28: #{tpu_custom_call.1} parent=11 // pred_fallthru
          _
        // Predicated region
        $region29: #{tpu_custom_call.1} parent=11 // pred_check
          %p385 = pneg %p150
        $region30: #{tpu_custom_call.1} parent=11 // pred_check_branch
          %387 = sbr.rel (%p385) target = $region32
        $region31: #{tpu_custom_call.1} parent=11 // pred_region
          %s389 = ssub.s32 16, 16
          %390 = vsyncadd [#allocation10], %s389
          %s392 = sshll.u32 [#allocation11], 4
          %s393 = int_to_ptr.vmem [resolvable:$true] %s392
          %395 = dma.hbm_to_vmem [thread:$0]  %s4, 16, %s393, [#allocation10]
        $region32: #{tpu_custom_call.1} parent=11 // pred_fallthru
          _
        // Predicated region
        $region33: #{tpu_custom_call.1} parent=11 // pred_check
          %p396 = pneg %p275
        $region34: #{tpu_custom_call.1} parent=11 // pred_check_branch
          %398 = sbr.rel (%p396) target = $region36
        $region35: #{tpu_custom_call.1} parent=11 // pred_region
          %s400 = ssub.s32 1024, 1024
          %401 = vsyncadd [#allocation19], %s400
          %s402 = sshll.u32 [#allocation18], 4
          %s403 = int_to_ptr.vmem [resolvable:$true] %s402
          %408 = dma.hbm_to_vmem [thread:$0]  %s9, 1024, %s403, [#allocation19], 64, 64, 4
        $region36: #{tpu_custom_call.1} parent=11 // pred_fallthru
          _
        // Predicated region
        $region37: #{tpu_custom_call.1} parent=11 // pred_check
          %p409 = pneg %p296
        $region38: #{tpu_custom_call.1} parent=11 // pred_check_branch
          %411 = sbr.rel (%p409) target = $region40
        $region39: #{tpu_custom_call.1} parent=11 // pred_region
          %s413 = ssub.s32 16, 16
          %414 = vsyncadd [#allocation19], %s413
          %s416 = sshll.u32 [#allocation20], 4
          %s417 = int_to_ptr.vmem [resolvable:$true] %s416
          %419 = dma.hbm_to_vmem [thread:$0]  %s10, 16, %s417, [#allocation19]
        $region40: #{tpu_custom_call.1} parent=11 // pred_fallthru
          _
      $region12: #{tpu_custom_call.1} parent=5 // pred_fallthru
        _
      %p420 = scmp.lt.s32.totalorder %s28, 2
      // Predicated region
      $region41: #{tpu_custom_call.1} parent=5 // pred_check
        %p421 = pneg %p420
      $region42: #{tpu_custom_call.1} parent=5 // pred_check_branch
        %423 = sbr.rel (%p421) target = $region44
      $region43: #{tpu_custom_call.1} parent=5 // pred_region
        // Predicated region
        $region45: #{tpu_custom_call.1} parent=43 // pred_check
          %p424 = pneg %p170
        $region46: #{tpu_custom_call.1} parent=43 // pred_check_branch
          %426 = sbr.rel (%p424) target = $region48
        $region47: #{tpu_custom_call.1} parent=43 // pred_region
          %s427 = sand.u32 %s28, 1
          %s428 = scalar_lea.sflag [#allocation13], %s427
          %s429 = sand.u32 %s160, 1
          %s430 = smul.addr %s429, 64
          %s431 = scalar_lea.vmem [#allocation12], %s430
          %s433 = ssub.s32 1024, 1024
          %434 = vsyncadd %s428, %s433
          %s435 = smul.addr %s36, 16
          %s436 = smul.addr %s435, 64
          %s437 = scalar_lea.hbm %s5, %s436
          %s438 = sshll.u32 %s431, 4
          %s439 = int_to_ptr.vmem [resolvable:$true] %s438
          %444 = dma.hbm_to_vmem [thread:$0]  %s437, 1024, %s439, %s428, 64, 64, 4
        $region48: #{tpu_custom_call.1} parent=43 // pred_fallthru
          _
        // Predicated region
        $region49: #{tpu_custom_call.1} parent=43 // pred_check
          %p445 = pneg %p196
        $region50: #{tpu_custom_call.1} parent=43 // pred_check_branch
          %447 = sbr.rel (%p445) target = $region52
        $region51: #{tpu_custom_call.1} parent=43 // pred_region
          %s448 = sand.u32 %s28, 1
          %s449 = scalar_lea.sflag [#allocation13], %s448
          %s450 = sand.u32 %s186, 1
          %s451 = scalar_lea.vmem [#allocation14], %s450
          %s453 = ssub.s32 16, 16
          %454 = vsyncadd %s449, %s453
          %s455 = smul.addr %s36, 16
          %s456 = scalar_lea.hbm %s6, %s455
          %s458 = sshll.u32 %s451, 4
          %s459 = int_to_ptr.vmem [resolvable:$true] %s458
          %461 = dma.hbm_to_vmem [thread:$0]  %s456, 16, %s459, %s449
        $region52: #{tpu_custom_call.1} parent=43 // pred_fallthru
          _
        // Predicated region
        $region53: #{tpu_custom_call.1} parent=43 // pred_check
          %p462 = pneg %p222
        $region54: #{tpu_custom_call.1} parent=43 // pred_check_branch
          %464 = sbr.rel (%p462) target = $region56
        $region55: #{tpu_custom_call.1} parent=43 // pred_region
          %s465 = sand.u32 %s28, 1
          %s466 = scalar_lea.sflag [#allocation16], %s465
          %s467 = sand.u32 %s212, 1
          %s468 = scalar_lea.vmem [#allocation15], %s467
          %s470 = ssub.s32 16, 16
          %471 = vsyncadd %s466, %s470
          %s472 = smul.addr %s36, 16
          %s473 = scalar_lea.hbm %s7, %s472
          %s475 = sshll.u32 %s468, 4
          %s476 = int_to_ptr.vmem [resolvable:$true] %s475
          %478 = dma.hbm_to_vmem [thread:$0]  %s473, 16, %s476, %s466
        $region56: #{tpu_custom_call.1} parent=43 // pred_fallthru
          _
        // Predicated region
        $region57: #{tpu_custom_call.1} parent=43 // pred_check
          %p479 = pneg %p248
        $region58: #{tpu_custom_call.1} parent=43 // pred_check_branch
          %481 = sbr.rel (%p479) target = $region60
        $region59: #{tpu_custom_call.1} parent=43 // pred_region
          %s482 = sand.u32 %s28, 1
          %s483 = scalar_lea.sflag [#allocation16], %s482
          %s484 = sand.u32 %s238, 1
          %s485 = scalar_lea.vmem [#allocation17], %s484
          %s487 = ssub.s32 16, 16
          %488 = vsyncadd %s483, %s487
          %s489 = smul.addr %s36, 16
          %s490 = scalar_lea.hbm %s8, %s489
          %s492 = sshll.u32 %s485, 4
          %s493 = int_to_ptr.vmem [resolvable:$true] %s492
          %495 = dma.hbm_to_vmem [thread:$0]  %s490, 16, %s493, %s483
        $region60: #{tpu_custom_call.1} parent=43 // pred_fallthru
          _
      $region44: #{tpu_custom_call.1} parent=5 // pred_fallthru
        _
      %p496 = scmp.le.s32.totalorder 1, %s28
      %p497 = scmp.lt.s32.totalorder %s28, 3
      %p498 = pnand %p496, %p497
      %p499 = pneg %p498
      // Predicated region
      $region61: #{tpu_custom_call.1} parent=5 // pred_check
        _
      $region62: #{tpu_custom_call.1} parent=5 // pred_check_branch
        %501 = sbr.rel (%p498) target = $region64
      $region63: #{tpu_custom_call.1} parent=5 // pred_region
        %s502 = ssub.s32 %s28, 1
        // Predicated region
        $region65: #{tpu_custom_call.1} parent=63 // pred_check
          %p503 = pneg %p66
        $region66: #{tpu_custom_call.1} parent=63 // pred_check_branch
          %505 = sbr.rel (%p503) target = $region68
        $region67: #{tpu_custom_call.1} parent=63 // pred_region
          %506 = dma.done [#allocation4], 128
        $region68: #{tpu_custom_call.1} parent=63 // pred_fallthru
          _
        // Predicated region
        $region69: #{tpu_custom_call.1} parent=63 // pred_check
          %p507 = pneg %p87
        $region70: #{tpu_custom_call.1} parent=63 // pred_check_branch
          %509 = sbr.rel (%p507) target = $region72
        $region71: #{tpu_custom_call.1} parent=63 // pred_region
          %510 = dma.done [#allocation7], 1024
        $region72: #{tpu_custom_call.1} parent=63 // pred_fallthru
          _
        // Predicated region
        $region73: #{tpu_custom_call.1} parent=63 // pred_check
          %p511 = pneg %p108
        $region74: #{tpu_custom_call.1} parent=63 // pred_check_branch
          %513 = sbr.rel (%p511) target = $region76
        $region75: #{tpu_custom_call.1} parent=63 // pred_region
          %514 = dma.done [#allocation7], 16
        $region76: #{tpu_custom_call.1} parent=63 // pred_fallthru
          _
        // Predicated region
        $region77: #{tpu_custom_call.1} parent=63 // pred_check
          %p515 = pneg %p129
        $region78: #{tpu_custom_call.1} parent=63 // pred_check_branch
          %517 = sbr.rel (%p515) target = $region80
        $region79: #{tpu_custom_call.1} parent=63 // pred_region
          %518 = dma.done [#allocation10], 16
        $region80: #{tpu_custom_call.1} parent=63 // pred_fallthru
          _
        // Predicated region
        $region81: #{tpu_custom_call.1} parent=63 // pred_check
          %p519 = pneg %p150
        $region82: #{tpu_custom_call.1} parent=63 // pred_check_branch
          %521 = sbr.rel (%p519) target = $region84
        $region83: #{tpu_custom_call.1} parent=63 // pred_region
          %522 = dma.done [#allocation10], 16
        $region84: #{tpu_custom_call.1} parent=63 // pred_fallthru
          _
        %s523 = sand.u32 %s33, 1
        %s524 = scalar_lea.sflag [#allocation13], %s523
        %s525 = sand.u32 %s163, 1
        %s526 = smul.addr %s525, 64
        %s527 = scalar_lea.vmem [#allocation12], %s526
        // Predicated region
        $region85: #{tpu_custom_call.1} parent=63 // pred_check
          %p528 = pneg %p176
        $region86: #{tpu_custom_call.1} parent=63 // pred_check_branch
          %530 = sbr.rel (%p528) target = $region88
        $region87: #{tpu_custom_call.1} parent=63 // pred_region
          %531 = dma.done %s524, 1024
        $region88: #{tpu_custom_call.1} parent=63 // pred_fallthru
          _
        %s532 = sand.u32 %s33, 1
        %s533 = scalar_lea.sflag [#allocation13], %s532
        %s534 = sand.u32 %s189, 1
        %s535 = scalar_lea.vmem [#allocation14], %s534
        // Predicated region
        $region89: #{tpu_custom_call.1} parent=63 // pred_check
          %p536 = pneg %p202
        $region90: #{tpu_custom_call.1} parent=63 // pred_check_branch
          %538 = sbr.rel (%p536) target = $region92
        $region91: #{tpu_custom_call.1} parent=63 // pred_region
          %539 = dma.done %s533, 16
        $region92: #{tpu_custom_call.1} parent=63 // pred_fallthru
          _
        %s540 = sand.u32 %s33, 1
        %s541 = scalar_lea.sflag [#allocation16], %s540
        %s542 = sand.u32 %s215, 1
        %s543 = scalar_lea.vmem [#allocation15], %s542
        // Predicated region
        $region93: #{tpu_custom_call.1} parent=63 // pred_check
          %p544 = pneg %p228
        $region94: #{tpu_custom_call.1} parent=63 // pred_check_branch
          %546 = sbr.rel (%p544) target = $region96
        $region95: #{tpu_custom_call.1} parent=63 // pred_region
          %547 = dma.done %s541, 16
        $region96: #{tpu_custom_call.1} parent=63 // pred_fallthru
          _
        %s548 = sand.u32 %s33, 1
        %s549 = scalar_lea.sflag [#allocation16], %s548
        %s550 = sand.u32 %s241, 1
        %s551 = scalar_lea.vmem [#allocation17], %s550
        // Predicated region
        $region97: #{tpu_custom_call.1} parent=63 // pred_check
          %p552 = pneg %p254
        $region98: #{tpu_custom_call.1} parent=63 // pred_check_branch
          %554 = sbr.rel (%p552) target = $region100
        $region99: #{tpu_custom_call.1} parent=63 // pred_region
          %555 = dma.done %s549, 16
        $region100: #{tpu_custom_call.1} parent=63 // pred_fallthru
          _
        // Predicated region
        $region101: #{tpu_custom_call.1} parent=63 // pred_check
          %p556 = pneg %p275
        $region102: #{tpu_custom_call.1} parent=63 // pred_check_branch
          %558 = sbr.rel (%p556) target = $region104
        $region103: #{tpu_custom_call.1} parent=63 // pred_region
          %559 = dma.done [#allocation19], 1024
        $region104: #{tpu_custom_call.1} parent=63 // pred_fallthru
          _
        // Predicated region
        $region105: #{tpu_custom_call.1} parent=63 // pred_check
          %p560 = pneg %p296
        $region106: #{tpu_custom_call.1} parent=63 // pred_check_branch
          %562 = sbr.rel (%p560) target = $region108
        $region107: #{tpu_custom_call.1} parent=63 // pred_region
          %563 = dma.done [#allocation19], 16
        $region108: #{tpu_custom_call.1} parent=63 // pred_fallthru
          _
        %p564 = pneg %p66
        %p565 = pneg %p63
        %p566 = pneg %p87
        %p567 = pneg %p84
        %p568 = pneg %p108
        %p569 = pneg %p105
        %p570 = pneg %p129
        %p571 = pneg %p126
        %p572 = pneg %p150
        %p573 = pneg %p147
        %s574 = sand.u32 %s33, 1
        %s575 = scalar_lea.sflag [#allocation13], %s574
        %s576 = sand.u32 %s163, 1
        %s577 = smul.addr %s576, 64
        %s578 = scalar_lea.vmem [#allocation12], %s577
        %p579 = pneg %p176
        %p580 = pneg %p173
        %s581 = sand.u32 %s33, 1
        %s582 = scalar_lea.sflag [#allocation13], %s581
        %s583 = sand.u32 %s189, 1
        %s584 = scalar_lea.vmem [#allocation14], %s583
        %p585 = pneg %p202
        %p586 = pneg %p199
        %s587 = sand.u32 %s33, 1
        %s588 = scalar_lea.sflag [#allocation16], %s587
        %s589 = sand.u32 %s215, 1
        %s590 = scalar_lea.vmem [#allocation15], %s589
        %p591 = pneg %p228
        %p592 = pneg %p225
        %s593 = sand.u32 %s33, 1
        %s594 = scalar_lea.sflag [#allocation16], %s593
        %s595 = sand.u32 %s241, 1
        %s596 = scalar_lea.vmem [#allocation17], %s595
        %p597 = pneg %p254
        %p598 = pneg %p251
        %p599 = pneg %p275
        %p600 = pneg %p272
        %p601 = pneg %p296
        %p602 = pneg %p293
        %p603 = pneg %p322
        %p604 = pneg %p319
        %p606 = scmp.eq.s32.totalorder %s38, 0
        // Predicated region
        $region109: #{tpu_custom_call.1} parent=63 // pred_check
          %p607 = pneg %p606
        $region110: #{tpu_custom_call.1} parent=63 // pred_check_branch
          %609 = sbr.rel (%p607) target = $region112
        $region111: #{tpu_custom_call.1} parent=63 // pred_region
          %v610 = vld [vmem:[#allocation3] sm:$0xff]
          %v611 = vpack.c.bf16 %v610, %v610
          %v612 = vld [vmem:[#allocation6] sm:$0xf]
          %v613 = vld [vmem:[#allocation6 + $0x4] sm:$0xf]
          %v614 = vld [vmem:[#allocation6 + $0x8] sm:$0xf]
          %v615 = vld [vmem:[#allocation6 + $0xc] sm:$0xf]
          %v616 = vld [vmem:[#allocation6 + $0x10] sm:$0xf]
          %v617 = vld [vmem:[#allocation6 + $0x14] sm:$0xf]
          %v618 = vld [vmem:[#allocation6 + $0x18] sm:$0xf]
          %v619 = vld [vmem:[#allocation6 + $0x1c] sm:$0xf]
          %v620 = vld [vmem:[#allocation6 + $0x20] sm:$0xf]
          %v621 = vld [vmem:[#allocation6 + $0x24] sm:$0xf]
          %v622 = vld [vmem:[#allocation6 + $0x28] sm:$0xf]
          %v623 = vld [vmem:[#allocation6 + $0x2c] sm:$0xf]
          %v624 = vld [vmem:[#allocation6 + $0x30] sm:$0xf]
          %v625 = vld [vmem:[#allocation6 + $0x34] sm:$0xf]
          %v626 = vld [vmem:[#allocation6 + $0x38] sm:$0xf]
          %v627 = vld [vmem:[#allocation6 + $0x3c] sm:$0xf]
          %v628 = vld [vmem:[#allocation8] sm:$0x1]
          %v630 = vlaneseq
          %v631 = vshrl.u32 %v630, 7
          %v632 = vsub.s32 0, %v631
          %v633 = vrot.slane %v628, %v632
          %v651 = vunpack.c.l.b16 %v612
          %v652 = vunpack.c.l.b16 %v613
          %v653 = vunpack.c.l.b16 %v614
          %v654 = vunpack.c.l.b16 %v615
          %v655 = vunpack.c.l.b16 %v616
          %v656 = vunpack.c.l.b16 %v617
          %v657 = vunpack.c.l.b16 %v618
          %v658 = vunpack.c.l.b16 %v619
          %v659 = vunpack.c.l.b16 %v620
          %v660 = vunpack.c.l.b16 %v621
          %v661 = vunpack.c.l.b16 %v622
          %v662 = vunpack.c.l.b16 %v623
          %v663 = vunpack.c.l.b16 %v624
          %v664 = vunpack.c.l.b16 %v625
          %v665 = vunpack.c.l.b16 %v626
          %v666 = vunpack.c.l.b16 %v627
          %v667 = vpack.c.b16 %v652, %v651
          %v668 = vpack.c.b16 %v654, %v653
          %v669 = vpack.c.b16 %v656, %v655
          %v670 = vpack.c.b16 %v658, %v657
          %v671 = vpack.c.b16 %v660, %v659
          %v672 = vpack.c.b16 %v662, %v661
          %v673 = vpack.c.b16 %v664, %v663
          %v674 = vpack.c.b16 %v666, %v665
          %683 = vmatprep.subr.bf16.mxu0 0
          %684 = vmatpush1.bf16.msra.mxu0 %v667
          %685 = vmatprep.subr.bf16.mxu0 0
          %686 = vmatpush1.bf16.msra.mxu0 %v668
          %687 = vmatprep.subr.bf16.mxu0 0
          %688 = vmatpush1.bf16.msra.mxu0 %v669
          %689 = vmatprep.subr.bf16.mxu0 0
          %690 = vmatpush1.bf16.msra.mxu0 %v670
          %691 = vmatprep.subr.bf16.mxu0 0
          %692 = vmatpush1.bf16.msra.mxu0 %v671
          %693 = vmatprep.subr.bf16.mxu0 0
          %694 = vmatpush1.bf16.msra.mxu0 %v672
          %695 = vmatprep.subr.bf16.mxu0 0
          %696 = vmatpush1.bf16.msra.mxu0 %v673
          %697 = vmatprep.subr.bf16.mxu0 0
          %698 = vmatpush1.bf16.msra.mxu0 %v674
          %699 = vmatprep.subr.bf16.mxu0 0
          %700 = vmatpush1.bf16.msra.mxu0 0
          %701 = vmatprep.subr.bf16.mxu0 0
          %702 = vmatpush1.bf16.msra.mxu0 0
          %703 = vmatprep.subr.bf16.mxu0 0
          %704 = vmatpush1.bf16.msra.mxu0 0
          %705 = vmatprep.subr.bf16.mxu0 0
          %706 = vmatpush1.bf16.msra.mxu0 0
          %707 = vmatprep.subr.bf16.mxu0 0
          %708 = vmatpush1.bf16.msra.mxu0 0
          %709 = vmatprep.subr.bf16.mxu0 0
          %710 = vmatpush1.bf16.msra.mxu0 0
          %711 = vmatprep.subr.bf16.mxu0 0
          %712 = vmatpush1.bf16.msra.mxu0 0
          %713 = vmatprep.subr.bf16.mxu0 0
          %714 = vmatpush1.bf16.msra.mxu0 0
          %715 = vmatprep.mubr.bf16.mxu0 0
          %716 = vmatmul.mubr.bf16.gmra.mrb[0].mxu0 %v611
          %v717 = vpop.f32.mrb[0].mxu0
          %v718 = vadd.f32 %v633, %v717
          %v719 = vpop.f32.mrb[0].mxu0
          %v720 = vpop.f32.mrb[0].mxu0
          %v721 = vpop.f32.mrb[0].mxu0
          %722 = vdwg.mxu0
          %vm723 = vcmp.ge.f32.partialorder %v718, 0.0
          %v724 = vmul.f32 %v718, 0.01
          %v725 = vsel %vm723, %v718, %v724
          %v726 = vld [vmem:[#allocation9] sm:$0x1]
          %v728 = vlaneseq
          %v729 = vshrl.u32 %v728, 7
          %v730 = vsub.s32 0, %v729
          %v731 = vrot.slane %v726, %v730
          %v733 = vmul.f32 %v725, %v731
          %v734 = vld [vmem:[#allocation11] sm:$0x1]
          %v736 = vlaneseq
          %v737 = vshrl.u32 %v736, 7
          %v738 = vsub.s32 0, %v737
          %v739 = vrot.slane %v734, %v738
          %v741 = vadd.f32 %v733, %v739
          %742 = vst [vmem:[#allocation2] sm:$0xff] %v741
        $region112: #{tpu_custom_call.1} parent=63 // pred_fallthru
          _
        %v743 = vld [vmem:[#allocation2] sm:$0xff]
        %v744 = vpack.c.bf16 %v743, %v743
        %v745 = vld [vmem:[%s527] sm:$0xf]
        %v746 = vld [vmem:[%s527 + $0x4] sm:$0xf]
        %v747 = vld [vmem:[%s527 + $0x8] sm:$0xf]
        %v748 = vld [vmem:[%s527 + $0xc] sm:$0xf]
        %v749 = vld [vmem:[%s527 + $0x10] sm:$0xf]
        %v750 = vld [vmem:[%s527 + $0x14] sm:$0xf]
        %v751 = vld [vmem:[%s527 + $0x18] sm:$0xf]
        %v752 = vld [vmem:[%s527 + $0x1c] sm:$0xf]
        %v753 = vld [vmem:[%s527 + $0x20] sm:$0xf]
        %v754 = vld [vmem:[%s527 + $0x24] sm:$0xf]
        %v755 = vld [vmem:[%s527 + $0x28] sm:$0xf]
        %v756 = vld [vmem:[%s527 + $0x2c] sm:$0xf]
        %v757 = vld [vmem:[%s527 + $0x30] sm:$0xf]
        %v758 = vld [vmem:[%s527 + $0x34] sm:$0xf]
        %v759 = vld [vmem:[%s527 + $0x38] sm:$0xf]
        %v760 = vld [vmem:[%s527 + $0x3c] sm:$0xf]
        %v761 = vld [vmem:[%s535] sm:$0x1]
        %v763 = vlaneseq
        %v764 = vshrl.u32 %v763, 7
        %v765 = vsub.s32 0, %v764
        %v766 = vrot.slane %v761, %v765
        %v784 = vunpack.c.l.b16 %v745
        %v785 = vunpack.c.l.b16 %v746
        %v786 = vunpack.c.l.b16 %v747
        %v787 = vunpack.c.l.b16 %v748
        %v788 = vunpack.c.l.b16 %v749
        %v789 = vunpack.c.l.b16 %v750
        %v790 = vunpack.c.l.b16 %v751
        %v791 = vunpack.c.l.b16 %v752
        %v792 = vunpack.c.l.b16 %v753
        %v793 = vunpack.c.l.b16 %v754
        %v794 = vunpack.c.l.b16 %v755
        %v795 = vunpack.c.l.b16 %v756
        %v796 = vunpack.c.l.b16 %v757
        %v797 = vunpack.c.l.b16 %v758
        %v798 = vunpack.c.l.b16 %v759
        %v799 = vunpack.c.l.b16 %v760
        %v800 = vpack.c.b16 %v785, %v784
        %v801 = vpack.c.b16 %v787, %v786
        %v802 = vpack.c.b16 %v789, %v788
        %v803 = vpack.c.b16 %v791, %v790
        %v804 = vpack.c.b16 %v793, %v792
        %v805 = vpack.c.b16 %v795, %v794
        %v806 = vpack.c.b16 %v797, %v796
        %v807 = vpack.c.b16 %v799, %v798
        %816 = vmatprep.subr.bf16.mxu0 0
        %817 = vmatpush1.bf16.msra.mxu0 %v800
        %818 = vmatprep.subr.bf16.mxu0 0
        %819 = vmatpush1.bf16.msra.mxu0 %v801
        %820 = vmatprep.subr.bf16.mxu0 0
        %821 = vmatpush1.bf16.msra.mxu0 %v802
        %822 = vmatprep.subr.bf16.mxu0 0
        %823 = vmatpush1.bf16.msra.mxu0 %v803
        %824 = vmatprep.subr.bf16.mxu0 0
        %825 = vmatpush1.bf16.msra.mxu0 %v804
        %826 = vmatprep.subr.bf16.mxu0 0
        %827 = vmatpush1.bf16.msra.mxu0 %v805
        %828 = vmatprep.subr.bf16.mxu0 0
        %829 = vmatpush1.bf16.msra.mxu0 %v806
        %830 = vmatprep.subr.bf16.mxu0 0
        %831 = vmatpush1.bf16.msra.mxu0 %v807
        %832 = vmatprep.subr.bf16.mxu0 0
        %833 = vmatpush1.bf16.msra.mxu0 0
        %834 = vmatprep.subr.bf16.mxu0 0
        %835 = vmatpush1.bf16.msra.mxu0 0
        %836 = vmatprep.subr.bf16.mxu0 0
        %837 = vmatpush1.bf16.msra.mxu0 0
        %838 = vmatprep.subr.bf16.mxu0 0
        %839 = vmatpush1.bf16.msra.mxu0 0
        %840 = vmatprep.subr.bf16.mxu0 0
        %841 = vmatpush1.bf16.msra.mxu0 0
        %842 = vmatprep.subr.bf16.mxu0 0
        %843 = vmatpush1.bf16.msra.mxu0 0
        %844 = vmatprep.subr.bf16.mxu0 0
        %845 = vmatpush1.bf16.msra.mxu0 0
        %846 = vmatprep.subr.bf16.mxu0 0
        %847 = vmatpush1.bf16.msra.mxu0 0
        %848 = vmatprep.mubr.bf16.mxu0 0
        %849 = vmatmul.mubr.bf16.gmra.mrb[0].mxu0 %v744
        %v850 = vpop.f32.mrb[0].mxu0
        %v851 = vadd.f32 %v766, %v850
        %v852 = vpop.f32.mrb[0].mxu0
        %v853 = vpop.f32.mrb[0].mxu0
        %v854 = vpop.f32.mrb[0].mxu0
        %855 = vdwg.mxu0
        %vm856 = vcmp.ge.f32.partialorder %v851, 0.0
        %v857 = vmul.f32 %v851, 0.01
        %v858 = vsel %vm856, %v851, %v857
        %v859 = vadd.f32 %v743, %v858
        %v860 = vld [vmem:[%s543] sm:$0x1]
        %v862 = vlaneseq
        %v863 = vshrl.u32 %v862, 7
        %v864 = vsub.s32 0, %v863
        %v865 = vrot.slane %v860, %v864
        %v867 = vmul.f32 %v859, %v865
        %v868 = vld [vmem:[%s551] sm:$0x1]
        %v870 = vlaneseq
        %v871 = vshrl.u32 %v870, 7
        %v872 = vsub.s32 0, %v871
        %v873 = vrot.slane %v868, %v872
        %v875 = vadd.f32 %v867, %v873
        %876 = vst [vmem:[#allocation2] sm:$0xff] %v875
        %p877 = scmp.eq.s32.totalorder %s38, 1
        // Predicated region
        $region113: #{tpu_custom_call.1} parent=63 // pred_check
          %p878 = pneg %p877
        $region114: #{tpu_custom_call.1} parent=63 // pred_check_branch
          %880 = sbr.rel (%p878) target = $region116
        $region115: #{tpu_custom_call.1} parent=63 // pred_region
          %v881 = vpack.c.bf16 %v875, %v875
          %v882 = vld [vmem:[#allocation18] sm:$0xf]
          %v883 = vld [vmem:[#allocation18 + $0x4] sm:$0xf]
          %v884 = vld [vmem:[#allocation18 + $0x8] sm:$0xf]
          %v885 = vld [vmem:[#allocation18 + $0xc] sm:$0xf]
          %v886 = vld [vmem:[#allocation18 + $0x10] sm:$0xf]
          %v887 = vld [vmem:[#allocation18 + $0x14] sm:$0xf]
          %v888 = vld [vmem:[#allocation18 + $0x18] sm:$0xf]
          %v889 = vld [vmem:[#allocation18 + $0x1c] sm:$0xf]
          %v890 = vld [vmem:[#allocation18 + $0x20] sm:$0xf]
          %v891 = vld [vmem:[#allocation18 + $0x24] sm:$0xf]
          %v892 = vld [vmem:[#allocation18 + $0x28] sm:$0xf]
          %v893 = vld [vmem:[#allocation18 + $0x2c] sm:$0xf]
          %v894 = vld [vmem:[#allocation18 + $0x30] sm:$0xf]
          %v895 = vld [vmem:[#allocation18 + $0x34] sm:$0xf]
          %v896 = vld [vmem:[#allocation18 + $0x38] sm:$0xf]
          %v897 = vld [vmem:[#allocation18 + $0x3c] sm:$0xf]
          %v898 = vld [vmem:[#allocation20] sm:$0x1]
          %v900 = vlaneseq
          %v901 = vshrl.u32 %v900, 7
          %v902 = vsub.s32 0, %v901
          %v903 = vrot.slane %v898, %v902
          %v921 = vunpack.c.l.b16 %v882
          %v922 = vunpack.c.l.b16 %v883
          %v923 = vunpack.c.l.b16 %v884
          %v924 = vunpack.c.l.b16 %v885
          %v925 = vunpack.c.l.b16 %v886
          %v926 = vunpack.c.l.b16 %v887
          %v927 = vunpack.c.l.b16 %v888
          %v928 = vunpack.c.l.b16 %v889
          %v929 = vunpack.c.l.b16 %v890
          %v930 = vunpack.c.l.b16 %v891
          %v931 = vunpack.c.l.b16 %v892
          %v932 = vunpack.c.l.b16 %v893
          %v933 = vunpack.c.l.b16 %v894
          %v934 = vunpack.c.l.b16 %v895
          %v935 = vunpack.c.l.b16 %v896
          %v936 = vunpack.c.l.b16 %v897
          %v937 = vpack.c.b16 %v922, %v921
          %v938 = vpack.c.b16 %v924, %v923
          %v939 = vpack.c.b16 %v926, %v925
          %v940 = vpack.c.b16 %v928, %v927
          %v941 = vpack.c.b16 %v930, %v929
          %v942 = vpack.c.b16 %v932, %v931
          %v943 = vpack.c.b16 %v934, %v933
          %v944 = vpack.c.b16 %v936, %v935
          %953 = vmatprep.subr.bf16.mxu0 0
          %954 = vmatpush1.bf16.msra.mxu0 %v937
          %955 = vmatprep.subr.bf16.mxu0 0
          %956 = vmatpush1.bf16.msra.mxu0 %v938
          %957 = vmatprep.subr.bf16.mxu0 0
          %958 = vmatpush1.bf16.msra.mxu0 %v939
          %959 = vmatprep.subr.bf16.mxu0 0
          %960 = vmatpush1.bf16.msra.mxu0 %v940
          %961 = vmatprep.subr.bf16.mxu0 0
          %962 = vmatpush1.bf16.msra.mxu0 %v941
          %963 = vmatprep.subr.bf16.mxu0 0
          %964 = vmatpush1.bf16.msra.mxu0 %v942
          %965 = vmatprep.subr.bf16.mxu0 0
          %966 = vmatpush1.bf16.msra.mxu0 %v943
          %967 = vmatprep.subr.bf16.mxu0 0
          %968 = vmatpush1.bf16.msra.mxu0 %v944
          %969 = vmatprep.subr.bf16.mxu0 0
          %970 = vmatpush1.bf16.msra.mxu0 0
          %971 = vmatprep.subr.bf16.mxu0 0
          %972 = vmatpush1.bf16.msra.mxu0 0
          %973 = vmatprep.subr.bf16.mxu0 0
          %974 = vmatpush1.bf16.msra.mxu0 0
          %975 = vmatprep.subr.bf16.mxu0 0
          %976 = vmatpush1.bf16.msra.mxu0 0
          %977 = vmatprep.subr.bf16.mxu0 0
          %978 = vmatpush1.bf16.msra.mxu0 0
          %979 = vmatprep.subr.bf16.mxu0 0
          %980 = vmatpush1.bf16.msra.mxu0 0
          %981 = vmatprep.subr.bf16.mxu0 0
          %982 = vmatpush1.bf16.msra.mxu0 0
          %983 = vmatprep.subr.bf16.mxu0 0
          %984 = vmatpush1.bf16.msra.mxu0 0
          %985 = vmatprep.mubr.bf16.mxu0 0
          %986 = vmatmul.mubr.bf16.gmra.mrb[0].mxu0 %v881
          %v987 = vpop.f32.mrb[0].mxu0
          %v988 = vadd.f32 %v903, %v987
          %v989 = vpop.f32.mrb[0].mxu0
          %v990 = vpop.f32.mrb[0].mxu0
          %v991 = vpop.f32.mrb[0].mxu0
          %992 = vdwg.mxu0
          %993 = vst [vmem:[#allocation21] sm:$0xff] %v988
        $region116: #{tpu_custom_call.1} parent=63 // pred_fallthru
          _
        // Predicated region
        $region117: #{tpu_custom_call.1} parent=63 // pred_check
          %p994 = pneg %p319
        $region118: #{tpu_custom_call.1} parent=63 // pred_check_branch
          %996 = sbr.rel (%p994) target = $region120
        $region119: #{tpu_custom_call.1} parent=63 // pred_region
          %s998 = ssub.s32 128, 128
          %999 = vsyncadd [#allocation5], %s998
          %s1000 = smul.addr %s37, 128
          %s1001 = scalar_lea.hbm %s11, %s1000
          %s1003 = sshll.u32 [#allocation21], 4
          %s1004 = int_to_ptr.vmem [resolvable:$true] %s1003
          %1006 = dma.vmem_to_hbm [thread:$0]  %s1004, 128, %s1001, [#allocation5]
        $region120: #{tpu_custom_call.1} parent=63 // pred_fallthru
          _
        // Predicated region
        $region121: #{tpu_custom_call.1} parent=63 // pred_check
          %p1007 = pneg %p319
        $region122: #{tpu_custom_call.1} parent=63 // pred_check_branch
          %1009 = sbr.rel (%p1007) target = $region124
        $region123: #{tpu_custom_call.1} parent=63 // pred_region
          %1010 = dma.done [#allocation5], 128
        $region124: #{tpu_custom_call.1} parent=63 // pred_fallthru
          _
      $region64: #{tpu_custom_call.1} parent=5 // pred_fallthru
        _
      %p1011 = scmp.le.s32.totalorder 2, %s28
      // Predicated region
      $region125: #{tpu_custom_call.1} parent=5 // pred_check
        %p1012 = pneg %p1011
      $region126: #{tpu_custom_call.1} parent=5 // pred_check_branch
        %1014 = sbr.rel (%p1012) target = $region128
      $region127: #{tpu_custom_call.1} parent=5 // pred_region
        %s1015 = ssub.s32 %s28, 2
      $region128: #{tpu_custom_call.1} parent=5 // pred_fallthru
        _
    $region6: #{tpu_custom_call.1} parent=1 // loop_footer
      %s32 = sadd.s32 1, %s28
    $region7: #{tpu_custom_call.1} parent=1 // loop_footer_branch
      %27 = sbr.rel target = $region3
    $region8: #{tpu_custom_call.1} parent=1 // loop_exit
      _
    %1016 = vsyncpa [#allocation4], 1
    %s1017 = scalar_lea.sflag [#allocation4], 1
    %1018 = vsyncpa %s1017, 1
    %1019 = vsyncpa [#allocation7], 1
    %1020 = vsyncpa [#allocation10], 1
    %1021 = vsyncpa [#allocation13], 1
    %s1022 = scalar_lea.sflag [#allocation13], 1
    %1023 = vsyncpa %s1022, 1
    %1024 = vsyncpa [#allocation16], 1
    %s1025 = scalar_lea.sflag [#allocation16], 1
    %1026 = vsyncpa %s1025, 1
    %1027 = vsyncpa [#allocation19], 1
    %1028 = vsyncpa [#allocation5], 1
    %s1029 = scalar_lea.sflag [#allocation5], 1
    %1030 = vsyncpa %s1029, 1

</llo_original>
